<compile_context>
chip_gen: v7x
topology: tpu7x:2x2x1
jax: 0.10.0
libtpu: 0.0.40
codegen_flags: <defaults>
</compile_context>

<pallas_src>
import functools
import math

import jax
import jax.numpy as jnp
from jax.experimental import pallas as pl
from jax.experimental.pallas import tpu as pltpu


def _round_up(a, m):
    return -(-a // m) * m


def _encdec_kernel(x_ref, w_enc_ref, b_enc_ref, w_dec_ref, b_dec_ref, o_ref,
                   *, compute_dtype):
    # In-kernel cast of the activation tile (VPU op, hidden under the MXU); the
    # wrapper passes x in its native dtype so no extra HBM pass is spent on it.
    x = x_ref[...].astype(compute_dtype)
    # Encoder hot path: matmul (MXU, f32 accumulation) + bias + tanh (EUP).
    emission = jnp.tanh(
        jnp.dot(x, w_enc_ref[...], preferred_element_type=jnp.float32)
        + b_enc_ref[...]
    )
    # Decoder hot path: matmul + bias.  (The encoder's second return value is
    # discarded, exactly as in the PyTorch module.)
    out = (
        jnp.dot(emission.astype(w_dec_ref.dtype), w_dec_ref[...],
                preferred_element_type=jnp.float32)
        + b_dec_ref[...]
    )
    o_ref[...] = out.astype(o_ref.dtype)


def make_encoder_decoder(w_enc, b_enc, w_dec, b_dec, *,
                         tile_m=8192,
                         compute_dtype=None,
                         out_dtype=None,
                         g=None,
                         min_grid_steps=8,
                         core_parallel=False):
    """Builds a fused forward(x): (B, T, D_in) -> (B, T, D_out).

    Weight/bias preprocessing (block-diagonal lane packing) happens ONCE here,
    not per forward call.
    """
    D_in, H = w_enc.shape
    H2, D_out = w_dec.shape
    assert H2 == H, "encoder hidden dim must match decoder input dim"
    if compute_dtype is None:
        compute_dtype = w_enc.dtype

    # Lane-packing factor: pack g consecutive rows into one "wide" row so the
    # kernel's input AND output last dims are multiples of 128 lanes (dense
    # loads/stores, no masked vst / strided DMA).  Derived from both dims.
    if g is None:
        g_in = 128 // math.gcd(128, D_in)
        g_out = 128 // math.gcd(128, D_out)
        g = g_in * g_out // math.gcd(g_in, g_out)          # lcm(g_in, g_out)

    # Block-diagonal weights run the g packed row-groups independently inside a
    # single lane-dense matmul: [x0|x1|..] @ blockdiag(W,..,W) = [x0@W|x1@W|..].
    # Computed once; resident (single block) inside the kernel.
    eye_g = jnp.eye(g, dtype=jnp.float32)
    w_enc_big = jnp.kron(eye_g, w_enc.astype(jnp.float32)).astype(compute_dtype)
    w_dec_big = jnp.kron(eye_g, w_dec.astype(jnp.float32)).astype(compute_dtype)
    b_enc_big = jnp.tile(b_enc.astype(jnp.float32), g).reshape(1, g * H)
    b_dec_big = jnp.tile(b_dec.astype(jnp.float32), g).reshape(1, g * D_out)

    kernel = functools.partial(_encdec_kernel, compute_dtype=compute_dtype)
    # CORE_PARALLEL is the knob that actually changes codegen on dual-TC chips
    # (v7x); plain "parallel" is the safe default everywhere.
    row_sem = pltpu.CORE_PARALLEL if core_parallel else "parallel"

    def forward(x):
        B, T, d = x.shape
        assert d == D_in
        odt = x.dtype if out_dtype is None else out_dtype
        M = B * T

        # Pad only to a multiple of g (<= g-1 rows); partial row tiles are
        # handled by the grid, so no padding to a tile multiple.
        Mg = _round_up(M, g)
        x2d = x.reshape(M, D_in)
        if Mg != M:
            x2d = jnp.pad(x2d, ((0, Mg - M), (0, 0)))
        Mw = Mg // g
        # Free row-major reshape: g consecutive rows -> one 128-lane-dense row.
        x_wide = x2d.reshape(Mw, g * D_in)                  # native dtype, no cast

        # --- row-tile selection (in wide rows) ---
        quantum = 16                                        # bf16-safe sublane quantum
        tile_rows = max(quantum, (max(tile_m // g, quantum) // quantum) * quantum)
        if min_grid_steps > 1:
            # Keep >= min_grid_steps steps (v7x dual-TC / pipeline overlap) but
            # never shrink a tile below ~512 wide rows (~256 KiB/stream at f32).
            cap = _round_up(pl.cdiv(Mw, min_grid_steps), quantum)
            floor = min(tile_rows, 512)
            tile_rows = max(min(tile_rows, cap), floor)
        if tile_rows >= Mw:
            tile_rows = Mw                                  # single full-extent block
        grid = (pl.cdiv(Mw, tile_rows),)

        out_wide = pl.pallas_call(
            kernel,
            out_shape=jax.ShapeDtypeStruct((Mw, g * D_out), odt),
            grid_spec=pltpu.PrefetchScalarGridSpec(
                num_scalar_prefetch=0,
                grid=grid,
                in_specs=[
                    pl.BlockSpec((tile_rows, g * D_in), lambda i: (i, 0)),  # x rows (lane-dense)
                    pl.BlockSpec((g * D_in, g * H), lambda i: (0, 0)),      # encoder W (resident)
                    pl.BlockSpec((1, g * H), lambda i: (0, 0)),             # encoder b
                    pl.BlockSpec((g * H, g * D_out), lambda i: (0, 0)),     # decoder W (resident)
                    pl.BlockSpec((1, g * D_out), lambda i: (0, 0)),         # decoder b
                ],
                out_specs=pl.BlockSpec((tile_rows, g * D_out), lambda i: (i, 0)),
            ),
            compiler_params=pltpu.CompilerParams(
                dimension_semantics=(row_sem,),
                vmem_limit_bytes=32 * 1024 * 1024,
            ),
        )(x_wide, w_enc_big, b_enc_big, w_dec_big, b_dec_big)

        # Free reshapes back to (B, T, D_out); drop the <= g-1 padded rows.
        out2d = out_wide.reshape(Mg, D_out)[:M]
        return out2d.reshape(B, T, D_out)

    return forward


def _reference(x, w_enc, b_enc, w_dec, b_dec):
    emission = jnp.tanh(jnp.einsum("btd,dh->bth", x, w_enc) + b_enc)  # encoder emission
    # encoder's second return value is discarded, as in the module
    return jnp.einsum("bth,ho->bto", emission, w_dec) + b_dec


if __name__ == "__main__":
    # small deterministic shapes: batch=2, seq=8, d_in=32, hidden=64, d_out=32
    B, T, D_in, H, D_out = 2, 8, 32, 64, 32

    key = jax.random.PRNGKey(0)
    k_x, k_we, k_be, k_wd, k_bd, k_x2 = jax.random.split(key, 6)

    x = jax.random.normal(k_x, (B, T, D_in), dtype=jnp.float32)
    w_enc = jax.random.normal(k_we, (D_in, H), dtype=jnp.float32) * 0.1
    b_enc = jax.random.normal(k_be, (H,), dtype=jnp.float32) * 0.1
    w_dec = jax.random.normal(k_wd, (H, D_out), dtype=jnp.float32) * 0.1
    b_dec = jax.random.normal(k_bd, (D_out,), dtype=jnp.float32) * 0.1

    ref = _reference(x, w_enc, b_enc, w_dec, b_dec)

    # f32 compute (default): weight expansion done once at construction time.
    fwd_f32 = make_encoder_decoder(w_enc, b_enc, w_dec, b_dec)
    out = jax.block_until_ready(fwd_f32(x))
    assert out.shape == (B, T, D_out)
    assert jnp.allclose(out, ref, atol=1e-5, rtol=1e-5), "f32 mismatch vs reference"

    # bf16 MXU-operand path (valid on v5e/v6e/v7x): in-kernel cast, f32 accum.
    fwd_bf16 = make_encoder_decoder(w_enc, b_enc, w_dec, b_dec,
                                    compute_dtype=jnp.bfloat16)
    out_bf16 = jax.block_until_ready(fwd_bf16(x))
    assert out_bf16.shape == (B, T, D_out)
    assert jnp.allclose(out_bf16, ref, atol=1e-1, rtol=1e-1), "bf16 mismatch vs reference"

    # Larger, non-aligned shape: exercises the <= g-1-row pad (M % g != 0) and a
    # partial trailing row tile (grid > 1, no padding to a tile multiple).
    B2, T2 = 3, 803                                   # M = 2409, 2409 % 4 == 1
    x2 = jax.random.normal(k_x2, (B2, T2, D_in), dtype=jnp.float32)
    ref2 = _reference(x2, w_enc, b_enc, w_dec, b_dec)
    out2 = jax.block_until_ready(fwd_f32(x2))
    assert out2.shape == (B2, T2, D_out)
    assert jnp.allclose(out2, ref2, atol=1e-4, rtol=1e-4), "tiled f32 mismatch vs reference"

    print("KERNEL_OK")
</pallas_src>

<mosaic_0001>
module attributes {stable_mosaic.version = 11 : i64} {
  func.func @_encdec_kernel(%arg0: i32, %arg1: memref<4x128xf32, #tpu.memory_space<vmem>>, %arg2: memref<128x256xf32, #tpu.memory_space<vmem>>, %arg3: memref<1x256xf32, #tpu.memory_space<vmem>>, %arg4: memref<256x128xf32, #tpu.memory_space<vmem>>, %arg5: memref<1x128xf32, #tpu.memory_space<vmem>>, %arg6: memref<4x128xf32, #tpu.memory_space<vmem>>) attributes {dimension_semantics = [#tpu.dimension_semantics<parallel>], iteration_bounds = array<i64: 1>, scalar_prefetch = 0 : i64, scratch_operands = 0 : i64, tpu.core_type = #tpu.core_type<tc>, window_params = [{transform_indices = @transform_0, window_bounds = array<i64: 4, 128>}, {pipeline_mode = #tpu.pipeline_mode<synchronous>, transform_indices = @transform_1, window_bounds = array<i64: 128, 256>}, {pipeline_mode = #tpu.pipeline_mode<synchronous>, transform_indices = @transform_2, window_bounds = array<i64: 1, 256>}, {pipeline_mode = #tpu.pipeline_mode<synchronous>, transform_indices = @transform_3, window_bounds = array<i64: 256, 128>}, {pipeline_mode = #tpu.pipeline_mode<synchronous>, transform_indices = @transform_4, window_bounds = array<i64: 1, 128>}, {transform_indices = @transform_5, window_bounds = array<i64: 4, 128>}]} {
    %c0 = arith.constant 0 : index
    %c0_0 = arith.constant 0 : index
    %0 = vector.load %arg1[%c0, %c0_0] : memref<4x128xf32, #tpu.memory_space<vmem>>, vector<4x128xf32>
    %c0_1 = arith.constant 0 : index
    %c0_2 = arith.constant 0 : index
    %1 = vector.load %arg2[%c0_1, %c0_2] : memref<128x256xf32, #tpu.memory_space<vmem>>, vector<128x256xf32>
    %cst = arith.constant dense<0.000000e+00> : vector<4x256xf32>
    %2 = tpu.matmul %0, %1, %cst {dimension_numbers = #tpu.dot_dimension_numbers<[1], [0], [0], [1], [0, 0, 1, 1], [], []>} : vector<4x128xf32>, vector<128x256xf32>, vector<4x256xf32> -> vector<4x256xf32>
    %c0_3 = arith.constant 0 : index
    %c0_4 = arith.constant 0 : index
    %3 = vector.load %arg3[%c0_3, %c0_4] : memref<1x256xf32, #tpu.memory_space<vmem>>, vector<1x256xf32>
    %4 = vector.broadcast %3 : vector<1x256xf32> to vector<4x256xf32>
    %5 = arith.addf %2, %4 : vector<4x256xf32>
    %6 = math.tanh %5 : vector<4x256xf32>
    %c0_5 = arith.constant 0 : index
    %c0_6 = arith.constant 0 : index
    %7 = vector.load %arg4[%c0_5, %c0_6] : memref<256x128xf32, #tpu.memory_space<vmem>>, vector<256x128xf32>
    %cst_7 = arith.constant dense<0.000000e+00> : vector<4x128xf32>
    %8 = tpu.matmul %6, %7, %cst_7 {dimension_numbers = #tpu.dot_dimension_numbers<[1], [0], [0], [1], [0, 0, 1, 1], [], []>} : vector<4x256xf32>, vector<256x128xf32>, vector<4x128xf32> -> vector<4x128xf32>
    %c0_8 = arith.constant 0 : index
    %c0_9 = arith.constant 0 : index
    %9 = vector.load %arg5[%c0_8, %c0_9] : memref<1x128xf32, #tpu.memory_space<vmem>>, vector<1x128xf32>
    %10 = vector.broadcast %9 : vector<1x128xf32> to vector<4x128xf32>
    %11 = arith.addf %8, %10 : vector<4x128xf32>
    %c0_10 = arith.constant 0 : index
    %c0_11 = arith.constant 0 : index
    %12 = vector.load %arg6[%c0_10, %c0_11] : memref<4x128xf32, #tpu.memory_space<vmem>>, vector<4x128xf32>
    tpu.vector_store %arg6[%c0_10, %c0_11], %11 {strides = array<i32>} : memref<4x128xf32, #tpu.memory_space<vmem>>, vector<4x128xf32>,
    return
  }
  func.func @transform_0(%arg0: i32) -> (i32, i32) {
    %c0_i32 = arith.constant 0 : i32
    %c0_i32_0 = arith.constant 0 : i32
    return %arg0, %c0_i32 : i32, i32
  }
  func.func @transform_1(%arg0: i32) -> (i32, i32) {
    %c0_i32 = arith.constant 0 : i32
    %c0_i32_0 = arith.constant 0 : i32
    %c0_i32_1 = arith.constant 0 : i32
    return %c0_i32, %c0_i32_0 : i32, i32
  }
  func.func @transform_2(%arg0: i32) -> (i32, i32) {
    %c0_i32 = arith.constant 0 : i32
    %c0_i32_0 = arith.constant 0 : i32
    %c0_i32_1 = arith.constant 0 : i32
    return %c0_i32, %c0_i32_0 : i32, i32
  }
  func.func @transform_3(%arg0: i32) -> (i32, i32) {
    %c0_i32 = arith.constant 0 : i32
    %c0_i32_0 = arith.constant 0 : i32
    %c0_i32_1 = arith.constant 0 : i32
    return %c0_i32, %c0_i32_0 : i32, i32
  }
  func.func @transform_4(%arg0: i32) -> (i32, i32) {
    %c0_i32 = arith.constant 0 : i32
    %c0_i32_0 = arith.constant 0 : i32
    %c0_i32_1 = arith.constant 0 : i32
    return %c0_i32, %c0_i32_0 : i32, i32
  }
  func.func @transform_5(%arg0: i32) -> (i32, i32) {
    %c0_i32 = arith.constant 0 : i32
    %c0_i32_0 = arith.constant 0 : i32
    return %arg0, %c0_i32 : i32, i32
  }
}

</mosaic_0001>

<llo_original>
// kernel: tpu_custom_call.1
$region0: #{tpu_custom_call.1}
  #allocation0 [shape = 'u32[]', space=smem, size = 0x4, offset = 0x4, fixed_abs, tag = 'smem constant byte address 0x4 - core index']
  #allocation1 [shape = 'u32[144,128]{1,0:T(1,128)}', space=vmem, size = 0x12000, scoped, tag = 'internal scratch']
  %s0 = inlined_call_operand.hbm [shape: f32[4,128], index: 0, kind: input, shape index: {}]
  %s1 = inlined_call_operand.hbm [shape: f32[128,256], index: 1, kind: input, shape index: {}]
  %s2 = inlined_call_operand.vmem [shape: f32[1,256], index: 2, kind: input, shape index: {}]
  %s3 = inlined_call_operand.hbm [shape: f32[256,128], index: 3, kind: input, shape index: {}]
  %s4 = inlined_call_operand.vmem [shape: f32[1,128], index: 4, kind: input, shape index: {}]
  %s5 = inlined_call_operand.hbm [shape: f32[4,128], index: 5, kind: output, shape index: {}]
  %s6 = sld [smem:[#allocation0]]
  $region42: #{tpu_custom_call.1} parent=0
    _
  %s8 = ssub.s32 1, %s6
  %s9 = scalar_select 0, %s8, %s6
  $region1: #{tpu_custom_call.1} parent=0
    #allocation2 [shape = 'u8[2048]{0}', space=vmem, size = 0x800, scoped, tag = 'input window, operand 0, single buffered']
    #allocation3 [shape = 's32[1]{0}', space=sflag, size = 0x4, scoped, tag = 'scoped memory for tpu_custom_call.1']
    #allocation4 [shape = 's32[1]{0}', space=sflag, size = 0x4, scoped, tag = 'scoped memory for tpu_custom_call.1']
    #allocation5 [shape = 'u8[131072]{0}', space=vmem, size = 0x20000, scoped, tag = 'input window, operand 1, single buffered']
    #allocation6 [shape = 's32[1]{0}', space=sflag, size = 0x4, scoped, tag = 'scoped memory for tpu_custom_call.1']
    #allocation7 [shape = 'u8[131072]{0}', space=vmem, size = 0x20000, scoped, tag = 'input window, operand 3, single buffered']
    #allocation8 [shape = 'u8[2048]{0}', space=vmem, size = 0x800, scoped, tag = 'output window, operand 0, single buffered']
    %10 = vsyncpa [#allocation3], 0
    %11 = vsyncpa [#allocation6], 0
    %12 = vsyncpa [#allocation4], 0
    // Predicated region
    $region2: #{tpu_custom_call.1} parent=1 // pred_check
      _
    $region3: #{tpu_custom_call.1} parent=1 // pred_check_branch
      %14 = sbr.rel (0) target = $region5
    $region4: #{tpu_custom_call.1} parent=1 // pred_region
      %s16 = ssub.s32 64, 64
      %17 = vsyncadd [#allocation3], %s16
      %s19 = sshll.u32 [#allocation2], 4
      %s20 = int_to_ptr.vmem [resolvable:$true] %s19
      %22 = dma.hbm_to_vmem [thread:$0]  %s0, 64, %s20, [#allocation3]
    $region5: #{tpu_custom_call.1} parent=1 // pred_fallthru
      _
    // Predicated region
    $region6: #{tpu_custom_call.1} parent=1 // pred_check
      _
    $region7: #{tpu_custom_call.1} parent=1 // pred_check_branch
      %24 = sbr.rel (0) target = $region9
    $region8: #{tpu_custom_call.1} parent=1 // pred_region
      %s26 = ssub.s32 4096, 4096
      %27 = vsyncadd [#allocation6], %s26
      %s28 = sshll.u32 [#allocation5], 4
      %s29 = int_to_ptr.vmem [resolvable:$true] %s28
      %34 = dma.hbm_to_vmem [thread:$0]  %s1, 4096, %s29, [#allocation6], 256, 256, 16
    $region9: #{tpu_custom_call.1} parent=1 // pred_fallthru
      _
    // Predicated region
    $region10: #{tpu_custom_call.1} parent=1 // pred_check
      _
    $region11: #{tpu_custom_call.1} parent=1 // pred_check_branch
      %36 = sbr.rel (0) target = $region13
    $region12: #{tpu_custom_call.1} parent=1 // pred_region
      _
    $region13: #{tpu_custom_call.1} parent=1 // pred_fallthru
      _
    // Predicated region
    $region14: #{tpu_custom_call.1} parent=1 // pred_check
      _
    $region15: #{tpu_custom_call.1} parent=1 // pred_check_branch
      %38 = sbr.rel (0) target = $region17
    $region16: #{tpu_custom_call.1} parent=1 // pred_region
      %s40 = ssub.s32 4096, 4096
      %41 = vsyncadd [#allocation6], %s40
      %s42 = sshll.u32 [#allocation7], 4
      %s43 = int_to_ptr.vmem [resolvable:$true] %s42
      %48 = dma.hbm_to_vmem [thread:$0]  %s3, 4096, %s43, [#allocation6], 128, 128, 8
    $region17: #{tpu_custom_call.1} parent=1 // pred_fallthru
      _
    // Predicated region
    $region18: #{tpu_custom_call.1} parent=1 // pred_check
      _
    $region19: #{tpu_custom_call.1} parent=1 // pred_check_branch
      %50 = sbr.rel (0) target = $region21
    $region20: #{tpu_custom_call.1} parent=1 // pred_region
      _
    $region21: #{tpu_custom_call.1} parent=1 // pred_fallthru
      _
    // Predicated region
    $region22: #{tpu_custom_call.1} parent=1 // pred_check
      _
    $region23: #{tpu_custom_call.1} parent=1 // pred_check_branch
      %52 = sbr.rel (0) target = $region25
    $region24: #{tpu_custom_call.1} parent=1 // pred_region
      %53 = dma.done [#allocation3], 64
    $region25: #{tpu_custom_call.1} parent=1 // pred_fallthru
      _
    // Predicated region
    $region26: #{tpu_custom_call.1} parent=1 // pred_check
      _
    $region27: #{tpu_custom_call.1} parent=1 // pred_check_branch
      %55 = sbr.rel (0) target = $region29
    $region28: #{tpu_custom_call.1} parent=1 // pred_region
      %56 = dma.done [#allocation6], 4096
    $region29: #{tpu_custom_call.1} parent=1 // pred_fallthru
      _
    // Predicated region
    $region30: #{tpu_custom_call.1} parent=1 // pred_check
      _
    $region31: #{tpu_custom_call.1} parent=1 // pred_check_branch
      %58 = sbr.rel (0) target = $region33
    $region32: #{tpu_custom_call.1} parent=1 // pred_region
      %59 = dma.done [#allocation6], 4096
    $region33: #{tpu_custom_call.1} parent=1 // pred_fallthru
      _
    %v60 = vld [vmem:[#allocation2] sm:$0xf]
    %v61 = vld [vmem:[#allocation5] sm:$0xff]
    %v62 = vld [vmem:[#allocation5 + $0x8] sm:$0xff]
    %v63 = vld [vmem:[#allocation5 + $0x10] sm:$0xff]
    %v64 = vld [vmem:[#allocation5 + $0x18] sm:$0xff]
    %v65 = vld [vmem:[#allocation5 + $0x20] sm:$0xff]
    %v66 = vld [vmem:[#allocation5 + $0x28] sm:$0xff]
    %v67 = vld [vmem:[#allocation5 + $0x30] sm:$0xff]
    %v68 = vld [vmem:[#allocation5 + $0x38] sm:$0xff]
    %v69 = vld [vmem:[#allocation5 + $0x40] sm:$0xff]
    %v70 = vld [vmem:[#allocation5 + $0x48] sm:$0xff]
    %v71 = vld [vmem:[#allocation5 + $0x50] sm:$0xff]
    %v72 = vld [vmem:[#allocation5 + $0x58] sm:$0xff]
    %v73 = vld [vmem:[#allocation5 + $0x60] sm:$0xff]
    %v74 = vld [vmem:[#allocation5 + $0x68] sm:$0xff]
    %v75 = vld [vmem:[#allocation5 + $0x70] sm:$0xff]
    %v76 = vld [vmem:[#allocation5 + $0x78] sm:$0xff]
    %v77 = vld [vmem:[#allocation5 + $0x80] sm:$0xff]
    %v78 = vld [vmem:[#allocation5 + $0x88] sm:$0xff]
    %v79 = vld [vmem:[#allocation5 + $0x90] sm:$0xff]
    %v80 = vld [vmem:[#allocation5 + $0x98] sm:$0xff]
    %v81 = vld [vmem:[#allocation5 + $0xa0] sm:$0xff]
    %v82 = vld [vmem:[#allocation5 + $0xa8] sm:$0xff]
    %v83 = vld [vmem:[#allocation5 + $0xb0] sm:$0xff]
    %v84 = vld [vmem:[#allocation5 + $0xb8] sm:$0xff]
    %v85 = vld [vmem:[#allocation5 + $0xc0] sm:$0xff]
    %v86 = vld [vmem:[#allocation5 + $0xc8] sm:$0xff]
    %v87 = vld [vmem:[#allocation5 + $0xd0] sm:$0xff]
    %v88 = vld [vmem:[#allocation5 + $0xd8] sm:$0xff]
    %v89 = vld [vmem:[#allocation5 + $0xe0] sm:$0xff]
    %v90 = vld [vmem:[#allocation5 + $0xe8] sm:$0xff]
    %v91 = vld [vmem:[#allocation5 + $0xf0] sm:$0xff]
    %v92 = vld [vmem:[#allocation5 + $0xf8] sm:$0xff]
    %v93 = vld [vmem:[%s2] sm:$0x3]
    %v95 = vlaneseq
    %v96 = vshrl.u32 %v95, 7
    %v97 = vsub.s32 0, %v96
    %v98 = vrot.slane %v93, %v97
    %v99 = vlaneseq
    %v100 = vshrl.u32 %v99, 7
    %v101 = vsub.s32 1, %v100
    %v102 = vrot.slane %v93, %v101
    %105 = vmatprep.subr.mxu0 %v62
    %106 = vmatpush1.msra.mxu0 %v61
    %107 = vmatprep.subr.mxu0 %v64
    %108 = vmatpush1.msra.mxu0 %v63
    %109 = vmatprep.subr.mxu0 %v66
    %110 = vmatpush1.msra.mxu0 %v65
    %111 = vmatprep.subr.mxu0 %v68
    %112 = vmatpush1.msra.mxu0 %v67
    %113 = vmatprep.subr.mxu0 %v70
    %114 = vmatpush1.msra.mxu0 %v69
    %115 = vmatprep.subr.mxu0 %v72
    %116 = vmatpush1.msra.mxu0 %v71
    %117 = vmatprep.subr.mxu0 %v74
    %118 = vmatpush1.msra.mxu0 %v73
    %119 = vmatprep.subr.mxu0 %v76
    %120 = vmatpush1.msra.mxu0 %v75
    %121 = vmatprep.subr.mxu0 %v78
    %122 = vmatpush1.msra.mxu0 %v77
    %123 = vmatprep.subr.mxu0 %v80
    %124 = vmatpush1.msra.mxu0 %v79
    %125 = vmatprep.subr.mxu0 %v82
    %126 = vmatpush1.msra.mxu0 %v81
    %127 = vmatprep.subr.mxu0 %v84
    %128 = vmatpush1.msra.mxu0 %v83
    %129 = vmatprep.subr.mxu0 %v86
    %130 = vmatpush1.msra.mxu0 %v85
    %131 = vmatprep.subr.mxu0 %v88
    %132 = vmatpush1.msra.mxu0 %v87
    %133 = vmatprep.subr.mxu0 %v90
    %134 = vmatpush1.msra.mxu0 %v89
    %135 = vmatprep.subr.mxu0 %v92
    %136 = vmatpush1.msra.mxu0 %v91
    %137 = vmatprep.subr.mxu0 0.0
    %138 = vmatpush1.msra.mxu0 0.0
    %139 = vmatprep.subr.mxu0 0.0
    %140 = vmatpush1.msra.mxu0 0.0
    %141 = vmatprep.subr.mxu0 0.0
    %142 = vmatpush1.msra.mxu0 0.0
    %143 = vmatprep.subr.mxu0 0.0
    %144 = vmatpush1.msra.mxu0 0.0
    %145 = vmatprep.subr.mxu0 0.0
    %146 = vmatpush1.msra.mxu0 0.0
    %147 = vmatprep.subr.mxu0 0.0
    %148 = vmatpush1.msra.mxu0 0.0
    %149 = vmatprep.subr.mxu0 0.0
    %150 = vmatpush1.msra.mxu0 0.0
    %151 = vmatprep.subr.mxu0 0.0
    %152 = vmatpush1.msra.mxu0 0.0
    %153 = vmatprep.subr.mxu0 0.0
    %154 = vmatpush1.msra.mxu0 0.0
    %155 = vmatprep.subr.mxu0 0.0
    %156 = vmatpush1.msra.mxu0 0.0
    %157 = vmatprep.subr.mxu0 0.0
    %158 = vmatpush1.msra.mxu0 0.0
    %159 = vmatprep.subr.mxu0 0.0
    %160 = vmatpush1.msra.mxu0 0.0
    %161 = vmatprep.subr.mxu0 0.0
    %162 = vmatpush1.msra.mxu0 0.0
    %163 = vmatprep.subr.mxu0 0.0
    %164 = vmatpush1.msra.mxu0 0.0
    %165 = vmatprep.subr.mxu0 0.0
    %166 = vmatpush1.msra.mxu0 0.0
    %167 = vmatprep.subr.mxu0 0.0
    %168 = vmatpush1.msra.mxu0 0.0
    %169 = vmatprep.mubr.f32.mxu0 0.0
    %170 = vmatmul.mubr.f32.gmra.mrb[0].mxu0 %v60
    %v171 = vpop.f32.mrb[0].mxu0
    %v172 = vadd.f32 %v98, %v171
    %v173 = vpop.f32.mrb[0].mxu0
    %v174 = vadd.f32 %v102, %v173
    %175 = vdwg.mxu0
    %v176 = vtanh.pop %v172
    %v177 = vtanh.pop %v174
    %v178 = vld [vmem:[#allocation7] sm:$0xff]
    %v179 = vld [vmem:[#allocation7 + $0x8] sm:$0xff]
    %v180 = vld [vmem:[#allocation7 + $0x10] sm:$0xff]
    %v181 = vld [vmem:[#allocation7 + $0x18] sm:$0xff]
    %v182 = vld [vmem:[#allocation7 + $0x20] sm:$0xff]
    %v183 = vld [vmem:[#allocation7 + $0x28] sm:$0xff]
    %v184 = vld [vmem:[#allocation7 + $0x30] sm:$0xff]
    %v185 = vld [vmem:[#allocation7 + $0x38] sm:$0xff]
    %v186 = vld [vmem:[#allocation7 + $0x40] sm:$0xff]
    %v187 = vld [vmem:[#allocation7 + $0x48] sm:$0xff]
    %v188 = vld [vmem:[#allocation7 + $0x50] sm:$0xff]
    %v189 = vld [vmem:[#allocation7 + $0x58] sm:$0xff]
    %v190 = vld [vmem:[#allocation7 + $0x60] sm:$0xff]
    %v191 = vld [vmem:[#allocation7 + $0x68] sm:$0xff]
    %v192 = vld [vmem:[#allocation7 + $0x70] sm:$0xff]
    %v193 = vld [vmem:[#allocation7 + $0x78] sm:$0xff]
    %v194 = vld [vmem:[#allocation7 + $0x80] sm:$0xff]
    %v195 = vld [vmem:[#allocation7 + $0x88] sm:$0xff]
    %v196 = vld [vmem:[#allocation7 + $0x90] sm:$0xff]
    %v197 = vld [vmem:[#allocation7 + $0x98] sm:$0xff]
    %v198 = vld [vmem:[#allocation7 + $0xa0] sm:$0xff]
    %v199 = vld [vmem:[#allocation7 + $0xa8] sm:$0xff]
    %v200 = vld [vmem:[#allocation7 + $0xb0] sm:$0xff]
    %v201 = vld [vmem:[#allocation7 + $0xb8] sm:$0xff]
    %v202 = vld [vmem:[#allocation7 + $0xc0] sm:$0xff]
    %v203 = vld [vmem:[#allocation7 + $0xc8] sm:$0xff]
    %v204 = vld [vmem:[#allocation7 + $0xd0] sm:$0xff]
    %v205 = vld [vmem:[#allocation7 + $0xd8] sm:$0xff]
    %v206 = vld [vmem:[#allocation7 + $0xe0] sm:$0xff]
    %v207 = vld [vmem:[#allocation7 + $0xe8] sm:$0xff]
    %v208 = vld [vmem:[#allocation7 + $0xf0] sm:$0xff]
    %v209 = vld [vmem:[#allocation7 + $0xf8] sm:$0xff]
    %v210 = vld [vmem:[%s4] sm:$0x1]
    %v212 = vlaneseq
    %v213 = vshrl.u32 %v212, 7
    %v214 = vsub.s32 0, %v213
    %v215 = vrot.slane %v210, %v214
    %217 = vmatprep.subr.mxu0 0.0
    %218 = vmatpush1.msra.mxu0 %v178
    %219 = vmatprep.subr.mxu0 0.0
    %220 = vmatpush1.msra.mxu0 %v179
    %221 = vmatprep.subr.mxu0 0.0
    %222 = vmatpush1.msra.mxu0 %v180
    %223 = vmatprep.subr.mxu0 0.0
    %224 = vmatpush1.msra.mxu0 %v181
    %225 = vmatprep.subr.mxu0 0.0
    %226 = vmatpush1.msra.mxu0 %v182
    %227 = vmatprep.subr.mxu0 0.0
    %228 = vmatpush1.msra.mxu0 %v183
    %229 = vmatprep.subr.mxu0 0.0
    %230 = vmatpush1.msra.mxu0 %v184
    %231 = vmatprep.subr.mxu0 0.0
    %232 = vmatpush1.msra.mxu0 %v185
    %233 = vmatprep.subr.mxu0 0.0
    %234 = vmatpush1.msra.mxu0 %v186
    %235 = vmatprep.subr.mxu0 0.0
    %236 = vmatpush1.msra.mxu0 %v187
    %237 = vmatprep.subr.mxu0 0.0
    %238 = vmatpush1.msra.mxu0 %v188
    %239 = vmatprep.subr.mxu0 0.0
    %240 = vmatpush1.msra.mxu0 %v189
    %241 = vmatprep.subr.mxu0 0.0
    %242 = vmatpush1.msra.mxu0 %v190
    %243 = vmatprep.subr.mxu0 0.0
    %244 = vmatpush1.msra.mxu0 %v191
    %245 = vmatprep.subr.mxu0 0.0
    %246 = vmatpush1.msra.mxu0 %v192
    %247 = vmatprep.subr.mxu0 0.0
    %248 = vmatpush1.msra.mxu0 %v193
    %249 = vmatprep.subr.mxu0 0.0
    %250 = vmatpush1.msra.mxu0 %v194
    %251 = vmatprep.subr.mxu0 0.0
    %252 = vmatpush1.msra.mxu0 %v195
    %253 = vmatprep.subr.mxu0 0.0
    %254 = vmatpush1.msra.mxu0 %v196
    %255 = vmatprep.subr.mxu0 0.0
    %256 = vmatpush1.msra.mxu0 %v197
    %257 = vmatprep.subr.mxu0 0.0
    %258 = vmatpush1.msra.mxu0 %v198
    %259 = vmatprep.subr.mxu0 0.0
    %260 = vmatpush1.msra.mxu0 %v199
    %261 = vmatprep.subr.mxu0 0.0
    %262 = vmatpush1.msra.mxu0 %v200
    %263 = vmatprep.subr.mxu0 0.0
    %264 = vmatpush1.msra.mxu0 %v201
    %265 = vmatprep.subr.mxu0 0.0
    %266 = vmatpush1.msra.mxu0 %v202
    %267 = vmatprep.subr.mxu0 0.0
    %268 = vmatpush1.msra.mxu0 %v203
    %269 = vmatprep.subr.mxu0 0.0
    %270 = vmatpush1.msra.mxu0 %v204
    %271 = vmatprep.subr.mxu0 0.0
    %272 = vmatpush1.msra.mxu0 %v205
    %273 = vmatprep.subr.mxu0 0.0
    %274 = vmatpush1.msra.mxu0 %v206
    %275 = vmatprep.subr.mxu0 0.0
    %276 = vmatpush1.msra.mxu0 %v207
    %277 = vmatprep.subr.mxu0 0.0
    %278 = vmatpush1.msra.mxu0 %v208
    %279 = vmatprep.subr.mxu0 0.0
    %280 = vmatpush1.msra.mxu0 %v209
    %281 = vmatprep.mubr.f32.mxu0 %v177
    %282 = vmatmul.mubr.f32.gmra.mrb[0].mxu0 %v176
    %v283 = vpop.f32.mrb[0].mxu0
    %v284 = vadd.f32 %v215, %v283
    %v285 = vpop.f32.mrb[0].mxu0
    %286 = vdwg.mxu0
    %287 = vst [vmem:[#allocation8] sm:$0xf] %v284
    // Predicated region
    $region34: #{tpu_custom_call.1} parent=1 // pred_check
      _
    $region35: #{tpu_custom_call.1} parent=1 // pred_check_branch
      %289 = sbr.rel (0) target = $region37
    $region36: #{tpu_custom_call.1} parent=1 // pred_region
      %s291 = ssub.s32 64, 64
      %292 = vsyncadd [#allocation4], %s291
      %s294 = sshll.u32 [#allocation8], 4
      %s295 = int_to_ptr.vmem [resolvable:$true] %s294
      %297 = dma.vmem_to_hbm [thread:$0]  %s295, 64, %s5, [#allocation4]
    $region37: #{tpu_custom_call.1} parent=1 // pred_fallthru
      _
    // Predicated region
    $region38: #{tpu_custom_call.1} parent=1 // pred_check
      _
    $region39: #{tpu_custom_call.1} parent=1 // pred_check_branch
      %299 = sbr.rel (0) target = $region41
    $region40: #{tpu_custom_call.1} parent=1 // pred_region
      %300 = dma.done [#allocation4], 64
    $region41: #{tpu_custom_call.1} parent=1 // pred_fallthru
      _
    %301 = vsyncpa [#allocation3], 1
    %302 = vsyncpa [#allocation6], 1
    %303 = vsyncpa [#allocation4], 1

</llo_original>
